<compile_context>
chip_gen: v6e
topology: v6e:2x2x1
jax: 0.10.0
libtpu: 0.0.40
codegen_flags: <defaults>
</compile_context>

<pallas_src>
import math

import jax
import jax.numpy as jnp
from jax.experimental import pallas as pl
from jax.experimental.pallas import tpu as pltpu

LEAKY_SLOPE = 0.01   # nn.LeakyReLU default
BN_EPS = 1e-5        # nn.BatchNorm1d default
LANES = 128          # TPU lane width
GRAN = 16            # row-padding granularity (bf16 sublane tile = (16, 128))


def _round_up(x, m):
    return (x + m - 1) // m * m


def _make_kernel(fp, hp, zp, n_mid, n_dec_mid, compute_dtype):
    """Kernel over one batch tile.

    Operands:
      x_ref : (TB, fp)    bf16 features (zero-padded to fp columns)
      w_ref : (R, 128)    bf16 slab: every layer's weight zero-padded to 128 output
                          lanes, rows padded to GRAN, stacked along rows (resident)
      b_ref : (NBp, 128)  f32 slab: one zero-padded 128-wide bias row per layer
      o_ref : (TB, 128)   f32 lane-dense output = [mask | outcome | zeros]
    """
    r_mid0 = fp
    r_fc = fp + n_mid * hp
    r_d1 = r_fc + hp
    r_dm0 = r_d1 + zp
    r_df = r_dm0 + n_dec_mid * 2 * hp

    def kernel(x_ref, w_ref, b_ref, o_ref):
        def leaky(h):                                    # f32 elementwise (v5e-safe)
            return jnp.where(h >= 0, h, LEAKY_SLOPE * h)

        def lin(h, r0, rows, cols, bi):
            w = w_ref[r0:r0 + rows, :cols]               # static slice of resident slab
            b = b_ref[bi:bi + 1, :cols]                  # (1, cols) f32
            return jnp.dot(h.astype(compute_dtype), w,
                           preferred_element_type=jnp.float32) + b

        # ---- encoder (Linear + folded BN -> LeakyReLU) ----
        h = leaky(lin(x_ref[...], 0, fp, hp, 0))
        for i in range(n_mid):                           # params read at point of use
            h = leaky(lin(h, r_mid0 + i * hp, hp, hp, 1 + i))
        z = lin(h, r_fc, hp, zp, 1 + n_mid)              # encoder.fc (no activation)

        # ---- fused decoder_mask || decoder_outcome (block-diagonal weights) ----
        d = leaky(lin(z, r_d1, zp, 2 * hp, 2 + n_mid))
        for i in range(n_dec_mid):
            d = leaky(lin(d, r_dm0 + i * 2 * hp, 2 * hp, 2 * hp, 3 + n_mid + i))
        o_ref[...] = lin(d, r_df, 2 * hp, LANES, 3 + n_mid + n_dec_mid)

    return kernel


def _xavier_normal(key, fan_in, fan_out):
    std = math.sqrt(2.0 / (fan_in + fan_out))
    return (std * jax.random.normal(key, (fan_in, fan_out))).astype(jnp.float32)


class ClassifierRegularizedPallas:
    def __init__(self, dim_x, cat_idx, cat_dims, emb_size=8, n_hidden=2,
                 dim_hidden=32, dropout=0.01, n_out=6, dim_z=8, *,
                 key, compute_dtype=jnp.bfloat16):
        del dropout  # TODO(synk): train-mode stochastic Dropout not reproduced (eval => identity)
        assert n_hidden >= 1
        assert dim_x + n_out <= LANES, "fused output must fit in 128 lanes"
        self.dim_x = dim_x
        self.cat_idx = list(cat_idx)
        self.n_hidden = n_hidden
        self.n_out = n_out
        self.dim_z = dim_z
        self.compute_dtype = compute_dtype
        self.n_dec_mid = 2
        self.non_cat_idx = [i for i in range(dim_x) if i not in self.cat_idx]
        fc_input_dim = len(cat_idx) * emb_size + (dim_x - len(cat_idx))

        # padded widths (GRAN keeps all slab row-slices bf16-tile aligned)
        self.fp = _round_up(fc_input_dim, GRAN)
        self.hp = _round_up(dim_hidden, GRAN)
        self.zp = _round_up(dim_z, GRAN)

        keys = iter(jax.random.split(key, 32))

        # Embedding tables (PyTorch nn.Embedding default init: N(0, 1)).
        self.emb_tables = [
            jax.random.normal(next(keys), (cd, emb_size), jnp.float32)
            for cd in cat_dims
        ]

        def lin_init(d_in, d_out):
            return _xavier_normal(next(keys), d_in, d_out), jnp.zeros((d_out,), jnp.float32)

        def bn_init(d):  # BatchNorm1d right after construction, eval mode
            return (jnp.ones((d,), jnp.float32), jnp.zeros((d,), jnp.float32),
                    jnp.zeros((d,), jnp.float32), jnp.ones((d,), jnp.float32))

        # ---- raw (PyTorch-equivalent) params, kept for the pure-JAX reference ----
        self.enc_blocks = [(*lin_init(fc_input_dim, dim_hidden), bn_init(dim_hidden))]
        for _ in range(n_hidden):
            self.enc_blocks.append((*lin_init(dim_hidden, dim_hidden), bn_init(dim_hidden)))
        self.enc_fc = lin_init(dim_hidden, dim_z)

        def dec_init(final_out):
            blocks, d_in = [], dim_z
            for _ in range(3):
                blocks.append((*lin_init(d_in, dim_hidden), bn_init(dim_hidden)))
                d_in = dim_hidden
            return blocks, lin_init(d_in, final_out)

        self.dec_mask_blocks, self.dec_mask_final = dec_init(dim_x)
        self.dec_out_blocks, self.dec_out_final = dec_init(n_out)

        # ---- fold BatchNorm into Linear, fuse decoders block-diagonally ----
        def fold(W, b, bn):
            gamma, beta, rmean, rvar = bn
            s = gamma / jnp.sqrt(rvar + BN_EPS)
            return W * s[None, :], b * s + (beta - rmean * s)

        def block_diag(A, B):
            z01 = jnp.zeros((A.shape[0], B.shape[1]), jnp.float32)
            z10 = jnp.zeros((B.shape[0], A.shape[1]), jnp.float32)
            return jnp.concatenate(
                [jnp.concatenate([A, z01], axis=1),
                 jnp.concatenate([z10, B], axis=1)], axis=0)

        w0, b0 = fold(*self.enc_blocks[0])
        wmid = [fold(*blk) for blk in self.enc_blocks[1:]]
        wfc, bfc = self.enc_fc

        Wm1, bm1 = fold(*self.dec_mask_blocks[0])
        Wo1, bo1 = fold(*self.dec_out_blocks[0])
        wd1 = jnp.concatenate([Wm1, Wo1], axis=1)
        bd1 = jnp.concatenate([bm1, bo1])
        wdm = []
        for mb, ob in zip(self.dec_mask_blocks[1:], self.dec_out_blocks[1:]):
            Wmf, bmf = fold(*mb)
            Wof, bof = fold(*ob)
            wdm.append((block_diag(Wmf, Wof), jnp.concatenate([bmf, bof])))
        wdf = block_diag(self.dec_mask_final[0], self.dec_out_final[0])
        bdf = jnp.concatenate([self.dec_mask_final[1], self.dec_out_final[1]])

        # ---- pack EVERYTHING into two slabs: one bf16 weight slab, one f32 bias slab
        w_tiles, b_rows = [], []

        def add_layer(W, b, rows_padded):
            Wp = jnp.zeros((rows_padded, LANES), jnp.float32)
            Wp = Wp.at[:W.shape[0], :W.shape[1]].set(W)          # explicit zero padding
            w_tiles.append(Wp)
            b_rows.append(jnp.zeros((LANES,), jnp.float32).at[:b.shape[0]].set(b))

        add_layer(w0, b0, self.fp)
        for Wf, bf_ in wmid:
            add_layer(Wf, bf_, self.hp)
        add_layer(wfc, bfc, self.hp)
        add_layer(wd1, bd1, self.zp)
        for Wf, bf_ in wdm:
            add_layer(Wf, bf_, 2 * self.hp)
        add_layer(wdf, bdf, 2 * self.hp)                          # final: 128-lane dense

        w_slab = jnp.concatenate(w_tiles, axis=0).astype(compute_dtype)
        b_slab = jnp.stack(b_rows)                                # (n_layers, 128) f32
        nb_p = _round_up(b_slab.shape[0], 8)
        if nb_p != b_slab.shape[0]:
            b_slab = jnp.pad(b_slab, ((0, nb_p - b_slab.shape[0]), (0, 0)))
        self.kernel_params = (w_slab, b_slab)

        self._flops_per_row = 2 * (fc_input_dim * dim_hidden
                                   + n_hidden * dim_hidden * dim_hidden
                                   + dim_hidden * dim_z
                                   + dim_z * 2 * dim_hidden
                                   + self.n_dec_mid * (2 * dim_hidden) ** 2
                                   + 2 * dim_hidden * (dim_x + n_out))

        self._kernel = _make_kernel(self.fp, self.hp, self.zp,
                                    n_mid=n_hidden, n_dec_mid=self.n_dec_mid,
                                    compute_dtype=compute_dtype)
        self._forward = jax.jit(self._forward_impl)

    # ---- full forward (featurize + pallas_call), fused under one jit ----
    def _forward_impl(self, x, emb_tables, params):
        w_slab, b_slab = params
        embs = [tbl[x[:, c].astype(jnp.int32)]
                for c, tbl in zip(self.cat_idx, emb_tables)]
        non_emb = x[:, jnp.asarray(self.non_cat_idx)]
        feats = jnp.concatenate(embs + [non_emb], axis=1).astype(jnp.float32)

        B, f_in = feats.shape
        # zero-pad feature dim to the slab's padded input width, cast to bf16 for MXU
        feats = jnp.pad(feats, ((0, 0), (0, self.fp - f_in))).astype(self.compute_dtype)

        # Batch tiling: one big tile on single-TC chips (v5e/v6e); >=2 near-equal
        # tiles (<=4096 rows) for big batches so the "parallel" axis can use both
        # v7x TensorCores while amortizing per-grid-step overhead.
        Bq = _round_up(B, GRAN)
        if Bq <= 1024:
            TB = Bq
        else:
            n_steps = max(2, -(-Bq // 4096))
            TB = _round_up(-(-Bq // n_steps), GRAN)
        Bp = _round_up(B, TB)
        if Bp != B:
            feats = jnp.pad(feats, ((0, Bp - B), (0, 0)))

        itemsize = w_slab.dtype.itemsize
        cost = pl.CostEstimate(
            flops=int(Bp * self._flops_per_row),
            transcendentals=0,
            bytes_accessed=int(Bp * (self.fp * itemsize + LANES * 4)
                               + w_slab.size * itemsize + b_slab.size * 4))

        out = pl.pallas_call(
            self._kernel,
            out_shape=jax.ShapeDtypeStruct((Bp, LANES), jnp.float32),
            grid=(Bp // TB,),
            in_specs=[pl.BlockSpec((TB, self.fp), lambda i: (i, 0)),
                      # grid-invariant slabs: constant index_map => resident, no re-DMA
                      pl.BlockSpec(w_slab.shape, lambda i: (0, 0)),
                      pl.BlockSpec(b_slab.shape, lambda i: (0, 0))],
            out_specs=pl.BlockSpec((TB, LANES), lambda i: (i, 0)),
            compiler_params=pltpu.CompilerParams(
                dimension_semantics=("parallel",),
                vmem_limit_bytes=64 * 1024 * 1024),
            cost_estimate=cost,
        )(feats, w_slab, b_slab)

        out = out[:B]
        return out[:, :self.dim_x], out[:, self.dim_x:self.dim_x + self.n_out]

    def __call__(self, x):
        return self._forward(x, self.emb_tables, self.kernel_params)

    # ---- pure-JAX reference: raw (unfolded, unfused, f32) params, same semantics ----
    def reference(self, x):
        embs = [tbl[x[:, c].astype(jnp.int32)]
                for c, tbl in zip(self.cat_idx, self.emb_tables)]
        non_emb = x[:, jnp.asarray(self.non_cat_idx)]
        h = jnp.concatenate(embs + [non_emb], axis=1).astype(jnp.float32)

        def bn_block(h, W, b, bn):
            gamma, beta, rmean, rvar = bn
            h = h @ W + b
            h = (h - rmean) / jnp.sqrt(rvar + BN_EPS) * gamma + beta
            return jnp.where(h >= 0, h, LEAKY_SLOPE * h)

        for blk in self.enc_blocks:
            h = bn_block(h, *blk)
        z = h @ self.enc_fc[0] + self.enc_fc[1]

        outs = []
        for blocks, (Wf, bf) in ((self.dec_mask_blocks, self.dec_mask_final),
                                 (self.dec_out_blocks, self.dec_out_final)):
            hd = z
            for blk in blocks:
                hd = bn_block(hd, *blk)
            outs.append(hd @ Wf + bf)
        return tuple(outs)


if __name__ == "__main__":
    key = jax.random.PRNGKey(0)
    k_model, k_x, k_cat = jax.random.split(key, 3)

    B, dim_x = 8, 10
    cat_idx = [0, 3]
    cat_dims = [5, 7]

    model = ClassifierRegularizedPallas(dim_x, cat_idx, cat_dims,
                                        emb_size=8, n_hidden=2, dim_hidden=32,
                                        dropout=0.01, n_out=6, dim_z=8, key=k_model)

    # Float input whose categorical columns hold integer codes.
    x = jax.random.normal(k_x, (B, dim_x), jnp.float32)
    for c, cd in zip(cat_idx, cat_dims):
        k_cat, k_sub = jax.random.split(k_cat)
        x = x.at[:, c].set(jax.random.randint(k_sub, (B,), 0, cd).astype(jnp.float32))

    mask, out = model(x)
    jax.block_until_ready((mask, out))

    ref_mask, ref_out = model.reference(x)
    assert mask.shape == (B, dim_x) and out.shape == (B, 6)
    # bf16 weights/activations into the MXU (f32 accumulate) => looser tolerance than f32
    assert jnp.allclose(mask, ref_mask, atol=3e-2, rtol=3e-2)
    assert jnp.allclose(out, ref_out, atol=3e-2, rtol=3e-2)
    print("KERNEL_OK")
</pallas_src>

<mosaic_0001>
module attributes {stable_mosaic.version = 11 : i64} {
  func.func @kernel(%arg0: i32, %arg1: memref<16x32xbf16, #tpu.memory_space<vmem>>, %arg2: memref<336x128xbf16, #tpu.memory_space<vmem>>, %arg3: memref<8x128xf32, #tpu.memory_space<vmem>>, %arg4: memref<16x128xf32, #tpu.memory_space<vmem>>) attributes {dimension_semantics = [#tpu.dimension_semantics<parallel>], iteration_bounds = array<i64: 1>, scalar_prefetch = 0 : i64, scratch_operands = 0 : i64, tpu.core_type = #tpu.core_type<tc>, window_params = [{transform_indices = @transform_0, window_bounds = array<i64: 16, 32>}, {pipeline_mode = #tpu.pipeline_mode<synchronous>, transform_indices = @transform_1, window_bounds = array<i64: 336, 128>}, {pipeline_mode = #tpu.pipeline_mode<synchronous>, transform_indices = @transform_2, window_bounds = array<i64: 8, 128>}, {transform_indices = @transform_3, window_bounds = array<i64: 16, 128>}]} {
    %c0 = arith.constant 0 : index
    %c0_0 = arith.constant 0 : index
    %0 = vector.load %arg1[%c0, %c0_0] : memref<16x32xbf16, #tpu.memory_space<vmem>>, vector<16x32xbf16>
    %c0_1 = arith.constant 0 : index
    %c0_2 = arith.constant 0 : index
    %1 = vector.load %arg2[%c0_1, %c0_2] : memref<336x128xbf16, #tpu.memory_space<vmem>>, vector<32x32xbf16>
    %c0_3 = arith.constant 0 : index
    %c0_4 = arith.constant 0 : index
    %2 = vector.load %arg3[%c0_3, %c0_4] : memref<8x128xf32, #tpu.memory_space<vmem>>, vector<1x32xf32>
    %cst = arith.constant dense<0.000000e+00> : vector<16x32xf32>
    %3 = tpu.matmul %0, %1, %cst {dimension_numbers = #tpu.dot_dimension_numbers<[1], [0], [0], [1], [0, 0, 1, 1], [], []>} : vector<16x32xbf16>, vector<32x32xbf16>, vector<16x32xf32> -> vector<16x32xf32>
    %4 = vector.broadcast %2 : vector<1x32xf32> to vector<16x32xf32>
    %5 = arith.addf %3, %4 : vector<16x32xf32>
    %cst_5 = arith.constant 0.000000e+00 : f32
    %6 = vector.broadcast %cst_5 : f32 to vector<16x32xf32>
    %7 = arith.cmpf oge, %5, %6 : vector<16x32xf32>
    %cst_6 = arith.constant 0.00999999977 : f32
    %8 = vector.broadcast %cst_6 : f32 to vector<16x32xf32>
    %9 = arith.mulf %8, %5 : vector<16x32xf32>
    %10 = arith.select %7, %5, %9 : vector<16x32xi1>, vector<16x32xf32>
    %c32 = arith.constant 32 : index
    %c0_7 = arith.constant 0 : index
    %11 = vector.load %arg2[%c32, %c0_7] : memref<336x128xbf16, #tpu.memory_space<vmem>>, vector<32x32xbf16>
    %c1 = arith.constant 1 : index
    %c0_8 = arith.constant 0 : index
    %12 = vector.load %arg3[%c1, %c0_8] : memref<8x128xf32, #tpu.memory_space<vmem>>, vector<1x32xf32>
    %13 = arith.truncf %10 : vector<16x32xf32> to vector<16x32xbf16>
    %cst_9 = arith.constant dense<0.000000e+00> : vector<16x32xf32>
    %14 = tpu.matmul %13, %11, %cst_9 {dimension_numbers = #tpu.dot_dimension_numbers<[1], [0], [0], [1], [0, 0, 1, 1], [], []>} : vector<16x32xbf16>, vector<32x32xbf16>, vector<16x32xf32> -> vector<16x32xf32>
    %15 = vector.broadcast %12 : vector<1x32xf32> to vector<16x32xf32>
    %16 = arith.addf %14, %15 : vector<16x32xf32>
    %cst_10 = arith.constant 0.000000e+00 : f32
    %17 = vector.broadcast %cst_10 : f32 to vector<16x32xf32>
    %18 = arith.cmpf oge, %16, %17 : vector<16x32xf32>
    %cst_11 = arith.constant 0.00999999977 : f32
    %19 = vector.broadcast %cst_11 : f32 to vector<16x32xf32>
    %20 = arith.mulf %19, %16 : vector<16x32xf32>
    %21 = arith.select %18, %16, %20 : vector<16x32xi1>, vector<16x32xf32>
    %c64 = arith.constant 64 : index
    %c0_12 = arith.constant 0 : index
    %22 = vector.load %arg2[%c64, %c0_12] : memref<336x128xbf16, #tpu.memory_space<vmem>>, vector<32x32xbf16>
    %c2 = arith.constant 2 : index
    %c0_13 = arith.constant 0 : index
    %23 = vector.load %arg3[%c2, %c0_13] : memref<8x128xf32, #tpu.memory_space<vmem>>, vector<1x32xf32>
    %24 = arith.truncf %21 : vector<16x32xf32> to vector<16x32xbf16>
    %cst_14 = arith.constant dense<0.000000e+00> : vector<16x32xf32>
    %25 = tpu.matmul %24, %22, %cst_14 {dimension_numbers = #tpu.dot_dimension_numbers<[1], [0], [0], [1], [0, 0, 1, 1], [], []>} : vector<16x32xbf16>, vector<32x32xbf16>, vector<16x32xf32> -> vector<16x32xf32>
    %26 = vector.broadcast %23 : vector<1x32xf32> to vector<16x32xf32>
    %27 = arith.addf %25, %26 : vector<16x32xf32>
    %cst_15 = arith.constant 0.000000e+00 : f32
    %28 = vector.broadcast %cst_15 : f32 to vector<16x32xf32>
    %29 = arith.cmpf oge, %27, %28 : vector<16x32xf32>
    %cst_16 = arith.constant 0.00999999977 : f32
    %30 = vector.broadcast %cst_16 : f32 to vector<16x32xf32>
    %31 = arith.mulf %30, %27 : vector<16x32xf32>
    %32 = arith.select %29, %27, %31 : vector<16x32xi1>, vector<16x32xf32>
    %c96 = arith.constant 96 : index
    %c0_17 = arith.constant 0 : index
    %33 = vector.load %arg2[%c96, %c0_17] : memref<336x128xbf16, #tpu.memory_space<vmem>>, vector<32x16xbf16>
    %c3 = arith.constant 3 : index
    %c0_18 = arith.constant 0 : index
    %34 = vector.load %arg3[%c3, %c0_18] : memref<8x128xf32, #tpu.memory_space<vmem>>, vector<1x16xf32>
    %35 = arith.truncf %32 : vector<16x32xf32> to vector<16x32xbf16>
    %cst_19 = arith.constant dense<0.000000e+00> : vector<16x16xf32>
    %36 = tpu.matmul %35, %33, %cst_19 {dimension_numbers = #tpu.dot_dimension_numbers<[1], [0], [0], [1], [0, 0, 1, 1], [], []>} : vector<16x32xbf16>, vector<32x16xbf16>, vector<16x16xf32> -> vector<16x16xf32>
    %37 = vector.broadcast %34 : vector<1x16xf32> to vector<16x16xf32>
    %38 = arith.addf %36, %37 : vector<16x16xf32>
    %c128 = arith.constant 128 : index
    %c0_20 = arith.constant 0 : index
    %39 = vector.load %arg2[%c128, %c0_20] : memref<336x128xbf16, #tpu.memory_space<vmem>>, vector<16x64xbf16>
    %c4 = arith.constant 4 : index
    %c0_21 = arith.constant 0 : index
    %40 = vector.load %arg3[%c4, %c0_21] : memref<8x128xf32, #tpu.memory_space<vmem>>, vector<1x64xf32>
    %41 = arith.truncf %38 : vector<16x16xf32> to vector<16x16xbf16>
    %cst_22 = arith.constant dense<0.000000e+00> : vector<16x64xf32>
    %42 = tpu.matmul %41, %39, %cst_22 {dimension_numbers = #tpu.dot_dimension_numbers<[1], [0], [0], [1], [0, 0, 1, 1], [], []>} : vector<16x16xbf16>, vector<16x64xbf16>, vector<16x64xf32> -> vector<16x64xf32>
    %43 = vector.broadcast %40 : vector<1x64xf32> to vector<16x64xf32>
    %44 = arith.addf %42, %43 : vector<16x64xf32>
    %cst_23 = arith.constant 0.000000e+00 : f32
    %45 = vector.broadcast %cst_23 : f32 to vector<16x64xf32>
    %46 = arith.cmpf oge, %44, %45 : vector<16x64xf32>
    %cst_24 = arith.constant 0.00999999977 : f32
    %47 = vector.broadcast %cst_24 : f32 to vector<16x64xf32>
    %48 = arith.mulf %47, %44 : vector<16x64xf32>
    %49 = arith.select %46, %44, %48 : vector<16x64xi1>, vector<16x64xf32>
    %c144 = arith.constant 144 : index
    %c0_25 = arith.constant 0 : index
    %50 = vector.load %arg2[%c144, %c0_25] : memref<336x128xbf16, #tpu.memory_space<vmem>>, vector<64x64xbf16>
    %c5 = arith.constant 5 : index
    %c0_26 = arith.constant 0 : index
    %51 = vector.load %arg3[%c5, %c0_26] : memref<8x128xf32, #tpu.memory_space<vmem>>, vector<1x64xf32>
    %52 = arith.truncf %49 : vector<16x64xf32> to vector<16x64xbf16>
    %cst_27 = arith.constant dense<0.000000e+00> : vector<16x64xf32>
    %53 = tpu.matmul %52, %50, %cst_27 {dimension_numbers = #tpu.dot_dimension_numbers<[1], [0], [0], [1], [0, 0, 1, 1], [], []>} : vector<16x64xbf16>, vector<64x64xbf16>, vector<16x64xf32> -> vector<16x64xf32>
    %54 = vector.broadcast %51 : vector<1x64xf32> to vector<16x64xf32>
    %55 = arith.addf %53, %54 : vector<16x64xf32>
    %cst_28 = arith.constant 0.000000e+00 : f32
    %56 = vector.broadcast %cst_28 : f32 to vector<16x64xf32>
    %57 = arith.cmpf oge, %55, %56 : vector<16x64xf32>
    %cst_29 = arith.constant 0.00999999977 : f32
    %58 = vector.broadcast %cst_29 : f32 to vector<16x64xf32>
    %59 = arith.mulf %58, %55 : vector<16x64xf32>
    %60 = arith.select %57, %55, %59 : vector<16x64xi1>, vector<16x64xf32>
    %c208 = arith.constant 208 : index
    %c0_30 = arith.constant 0 : index
    %61 = vector.load %arg2[%c208, %c0_30] : memref<336x128xbf16, #tpu.memory_space<vmem>>, vector<64x64xbf16>
    %c6 = arith.constant 6 : index
    %c0_31 = arith.constant 0 : index
    %62 = vector.load %arg3[%c6, %c0_31] : memref<8x128xf32, #tpu.memory_space<vmem>>, vector<1x64xf32>
    %63 = arith.truncf %60 : vector<16x64xf32> to vector<16x64xbf16>
    %cst_32 = arith.constant dense<0.000000e+00> : vector<16x64xf32>
    %64 = tpu.matmul %63, %61, %cst_32 {dimension_numbers = #tpu.dot_dimension_numbers<[1], [0], [0], [1], [0, 0, 1, 1], [], []>} : vector<16x64xbf16>, vector<64x64xbf16>, vector<16x64xf32> -> vector<16x64xf32>
    %65 = vector.broadcast %62 : vector<1x64xf32> to vector<16x64xf32>
    %66 = arith.addf %64, %65 : vector<16x64xf32>
    %cst_33 = arith.constant 0.000000e+00 : f32
    %67 = vector.broadcast %cst_33 : f32 to vector<16x64xf32>
    %68 = arith.cmpf oge, %66, %67 : vector<16x64xf32>
    %cst_34 = arith.constant 0.00999999977 : f32
    %69 = vector.broadcast %cst_34 : f32 to vector<16x64xf32>
    %70 = arith.mulf %69, %66 : vector<16x64xf32>
    %71 = arith.select %68, %66, %70 : vector<16x64xi1>, vector<16x64xf32>
    %c272 = arith.constant 272 : index
    %c0_35 = arith.constant 0 : index
    %72 = vector.load %arg2[%c272, %c0_35] : memref<336x128xbf16, #tpu.memory_space<vmem>>, vector<64x128xbf16>
    %c7 = arith.constant 7 : index
    %c0_36 = arith.constant 0 : index
    %73 = vector.load %arg3[%c7, %c0_36] : memref<8x128xf32, #tpu.memory_space<vmem>>, vector<1x128xf32>
    %74 = arith.truncf %71 : vector<16x64xf32> to vector<16x64xbf16>
    %cst_37 = arith.constant dense<0.000000e+00> : vector<16x128xf32>
    %75 = tpu.matmul %74, %72, %cst_37 {dimension_numbers = #tpu.dot_dimension_numbers<[1], [0], [0], [1], [0, 0, 1, 1], [], []>} : vector<16x64xbf16>, vector<64x128xbf16>, vector<16x128xf32> -> vector<16x128xf32>
    %76 = vector.broadcast %73 : vector<1x128xf32> to vector<16x128xf32>
    %77 = arith.addf %75, %76 : vector<16x128xf32>
    %c0_38 = arith.constant 0 : index
    %c0_39 = arith.constant 0 : index
    %78 = vector.load %arg4[%c0_38, %c0_39] : memref<16x128xf32, #tpu.memory_space<vmem>>, vector<16x128xf32>
    tpu.vector_store %arg4[%c0_38, %c0_39], %77 {strides = array<i32>} : memref<16x128xf32, #tpu.memory_space<vmem>>, vector<16x128xf32>,
    return
  }
  func.func @transform_0(%arg0: i32) -> (i32, i32) {
    %c0_i32 = arith.constant 0 : i32
    %c0_i32_0 = arith.constant 0 : i32
    return %arg0, %c0_i32 : i32, i32
  }
  func.func @transform_1(%arg0: i32) -> (i32, i32) {
    %c0_i32 = arith.constant 0 : i32
    %c0_i32_0 = arith.constant 0 : i32
    %c0_i32_1 = arith.constant 0 : i32
    return %c0_i32, %c0_i32_0 : i32, i32
  }
  func.func @transform_2(%arg0: i32) -> (i32, i32) {
    %c0_i32 = arith.constant 0 : i32
    %c0_i32_0 = arith.constant 0 : i32
    %c0_i32_1 = arith.constant 0 : i32
    return %c0_i32, %c0_i32_0 : i32, i32
  }
  func.func @transform_3(%arg0: i32) -> (i32, i32) {
    %c0_i32 = arith.constant 0 : i32
    %c0_i32_0 = arith.constant 0 : i32
    return %arg0, %c0_i32 : i32, i32
  }
}

</mosaic_0001>

<llo_original>
// kernel: _forward_impl.1
$region0: #{_forward_impl.1}
  #allocation0 [shape = 'u32[]', space=smem, size = 0x4, offset = 0x4, fixed_abs, tag = 'smem constant byte address 0x4 - core index']
  #allocation1 [shape = 'u32[144,128]{1,0:T(1,128)}', space=vmem, size = 0x12000, scoped, tag = 'internal scratch']
  %s0 = inlined_call_operand.vmem [shape: bf16[16,32], index: 0, kind: input, shape index: {}]
  %s1 = inlined_call_operand.vmem [shape: bf16[336,128], index: 1, kind: input, shape index: {}]
  %s2 = inlined_call_operand.vmem [shape: f32[8,128], index: 2, kind: input, shape index: {}]
  %s3 = inlined_call_operand.vmem [shape: f32[16,128], index: 3, kind: output, shape index: {}]
  %s4 = sld [smem:[#allocation0]]
  $region22: #{_forward_impl.1} parent=0
    _
  %s6 = ssub.s32 1, %s4
  %s7 = scalar_select 0, %s6, %s4
  // Predicated region
  $region2: #{_forward_impl.1} parent=0 // pred_check
    _
  $region3: #{_forward_impl.1} parent=0 // pred_check_branch
    %9 = sbr.rel (0) target = $region5
  $region4: #{_forward_impl.1} parent=0 // pred_region
    _
  $region5: #{_forward_impl.1} parent=0 // pred_fallthru
    _
  // Predicated region
  $region6: #{_forward_impl.1} parent=0 // pred_check
    _
  $region7: #{_forward_impl.1} parent=0 // pred_check_branch
    %11 = sbr.rel (0) target = $region9
  $region8: #{_forward_impl.1} parent=0 // pred_region
    _
  $region9: #{_forward_impl.1} parent=0 // pred_fallthru
    _
  // Predicated region
  $region10: #{_forward_impl.1} parent=0 // pred_check
    _
  $region11: #{_forward_impl.1} parent=0 // pred_check_branch
    %13 = sbr.rel (0) target = $region13
  $region12: #{_forward_impl.1} parent=0 // pred_region
    _
  $region13: #{_forward_impl.1} parent=0 // pred_fallthru
    _
  %v15 = vld [vmem:[%s0] sm:$0xf]
  %v16 = vld [vmem:[%s0 + $0x4] sm:$0xf]
  %v17 = vld [vmem:[%s1] sm:$0xf]
  %v18 = vld [vmem:[%s1 + $0x4] sm:$0xf]
  %v19 = vld [vmem:[%s1 + $0x8] sm:$0xf]
  %v20 = vld [vmem:[%s1 + $0xc] sm:$0xf]
  %v21 = vld [vmem:[%s2] sm:$0x1]
  %v22 = vlaneseq
  %v23 = vshrl.u32 %v22, 7
  %v24 = vsub.s32 0, %v23
  %v25 = vrot.slane %v21, %v24
  %v28 = vunpack.c.l.b16 %v15
  %v29 = vunpack.c.l.b16 %v16
  %v30 = vpack.c.b16 %v29, %v28
  %v35 = vunpack.c.l.b16 %v17
  %v36 = vunpack.c.l.b16 %v18
  %v37 = vunpack.c.l.b16 %v19
  %v38 = vunpack.c.l.b16 %v20
  %v39 = vpack.c.b16 %v36, %v35
  %v40 = vpack.c.b16 %v38, %v37
  %vm43 = vcmask 261120
  %v45 = vsel %vm43, %v30, 0
  %47 = vmatprep.subr.bf16.mxu0 0
  %48 = vmatpush1.bf16.msra.mxu0 0
  %49 = vmatprep.subr.bf16.mxu0 0
  %50 = vmatpush1.bf16.msra.mxu0 0
  %51 = vmatprep.subr.bf16.mxu0 0
  %52 = vmatpush1.bf16.msra.mxu0 0
  %53 = vmatprep.subr.bf16.mxu0 0
  %54 = vmatpush1.bf16.msra.mxu0 0
  %55 = vmatprep.subr.bf16.mxu0 0
  %56 = vmatpush1.bf16.msra.mxu0 0
  %57 = vmatprep.subr.bf16.mxu0 0
  %58 = vmatpush1.bf16.msra.mxu0 0
  %59 = vmatprep.subr.bf16.mxu0 0
  %60 = vmatpush1.bf16.msra.mxu0 %v40
  %61 = vmatprep.subr.bf16.mxu0 0
  %62 = vmatpush1.bf16.msra.mxu0 %v39
  %63 = vmatprep.subr.bf16.mxu0 0
  %64 = vmatpush2.bf16.msra.mxu0 0
  %65 = vmatprep.subr.bf16.mxu0 0
  %66 = vmatpush2.bf16.msra.mxu0 0
  %67 = vmatprep.subr.bf16.mxu0 0
  %68 = vmatpush2.bf16.msra.mxu0 0
  %69 = vmatprep.subr.bf16.mxu0 0
  %70 = vmatpush2.bf16.msra.mxu0 0
  %71 = vmatprep.subr.bf16.mxu0 0
  %72 = vmatpush2.bf16.msra.mxu0 0
  %73 = vmatprep.subr.bf16.mxu0 0
  %74 = vmatpush2.bf16.msra.mxu0 0
  %75 = vmatprep.subr.bf16.mxu0 0
  %76 = vmatpush2.bf16.msra.mxu0 0
  %77 = vmatprep.subr.bf16.mxu0 0
  %78 = vmatpush2.bf16.msra.mxu0 0
  %79 = vmatprep.mubr.bf16.mxu0 0
  %80 = vmatmul.mubr.bf16.gmra.mxu0 %v45
  %v81 = vpop.f32.mrf.mxu0
  %v82 = vadd.f32 %v25, %v81
  %v83 = vpop.f32.mrf.mxu0
  %v84 = vpop.f32.mrf.mxu0
  %v85 = vadd.f32 %v25, %v84
  %v86 = vpop.f32.mrf.mxu0
  %87 = vdwg.mxu0
  %vm88 = vcmp.ge.f32.partialorder %v82, 0.0
  %vm89 = vcmp.ge.f32.partialorder %v85, 0.0
  %v90 = vmul.f32 %v82, 0.01
  %v91 = vmul.f32 %v85, 0.01
  %v92 = vsel %vm88, %v82, %v90
  %v93 = vsel %vm89, %v85, %v91
  %v94 = vld [vmem:[%s1 + $0x10] sm:$0xf]
  %v95 = vld [vmem:[%s1 + $0x14] sm:$0xf]
  %v96 = vld [vmem:[%s1 + $0x18] sm:$0xf]
  %v97 = vld [vmem:[%s1 + $0x1c] sm:$0xf]
  %v98 = vld [vmem:[%s2 + $0x1] sm:$0x1]
  %v99 = vpack.c.bf16 %v93, %v92
  %v100 = vlaneseq
  %v101 = vshrl.u32 %v100, 7
  %v102 = vsub.s32 0, %v101
  %v103 = vrot.slane %v98, %v102
  %v108 = vunpack.c.l.b16 %v94
  %v109 = vunpack.c.l.b16 %v95
  %v110 = vunpack.c.l.b16 %v96
  %v111 = vunpack.c.l.b16 %v97
  %v112 = vpack.c.b16 %v109, %v108
  %v113 = vpack.c.b16 %v111, %v110
  %v117 = vsel %vm43, %v99, 0
  %119 = vmatprep.subr.bf16.mxu0 0
  %120 = vmatpush1.bf16.msra.mxu0 0
  %121 = vmatprep.subr.bf16.mxu0 0
  %122 = vmatpush1.bf16.msra.mxu0 0
  %123 = vmatprep.subr.bf16.mxu0 0
  %124 = vmatpush1.bf16.msra.mxu0 0
  %125 = vmatprep.subr.bf16.mxu0 0
  %126 = vmatpush1.bf16.msra.mxu0 0
  %127 = vmatprep.subr.bf16.mxu0 0
  %128 = vmatpush1.bf16.msra.mxu0 0
  %129 = vmatprep.subr.bf16.mxu0 0
  %130 = vmatpush1.bf16.msra.mxu0 0
  %131 = vmatprep.subr.bf16.mxu0 0
  %132 = vmatpush1.bf16.msra.mxu0 %v113
  %133 = vmatprep.subr.bf16.mxu0 0
  %134 = vmatpush1.bf16.msra.mxu0 %v112
  %135 = vmatprep.subr.bf16.mxu0 0
  %136 = vmatpush2.bf16.msra.mxu0 0
  %137 = vmatprep.subr.bf16.mxu0 0
  %138 = vmatpush2.bf16.msra.mxu0 0
  %139 = vmatprep.subr.bf16.mxu0 0
  %140 = vmatpush2.bf16.msra.mxu0 0
  %141 = vmatprep.subr.bf16.mxu0 0
  %142 = vmatpush2.bf16.msra.mxu0 0
  %143 = vmatprep.subr.bf16.mxu0 0
  %144 = vmatpush2.bf16.msra.mxu0 0
  %145 = vmatprep.subr.bf16.mxu0 0
  %146 = vmatpush2.bf16.msra.mxu0 0
  %147 = vmatprep.subr.bf16.mxu0 0
  %148 = vmatpush2.bf16.msra.mxu0 0
  %149 = vmatprep.subr.bf16.mxu0 0
  %150 = vmatpush2.bf16.msra.mxu0 0
  %151 = vmatprep.mubr.bf16.mxu0 0
  %152 = vmatmul.mubr.bf16.gmra.mxu0 %v117
  %v153 = vpop.f32.mrf.mxu0
  %v154 = vadd.f32 %v103, %v153
  %v155 = vpop.f32.mrf.mxu0
  %v156 = vpop.f32.mrf.mxu0
  %v157 = vadd.f32 %v103, %v156
  %v158 = vpop.f32.mrf.mxu0
  %159 = vdwg.mxu0
  %vm160 = vcmp.ge.f32.partialorder %v154, 0.0
  %vm161 = vcmp.ge.f32.partialorder %v157, 0.0
  %v162 = vmul.f32 %v154, 0.01
  %v163 = vmul.f32 %v157, 0.01
  %v164 = vsel %vm160, %v154, %v162
  %v165 = vsel %vm161, %v157, %v163
  %v166 = vld [vmem:[%s1 + $0x20] sm:$0xf]
  %v167 = vld [vmem:[%s1 + $0x24] sm:$0xf]
  %v168 = vld [vmem:[%s1 + $0x28] sm:$0xf]
  %v169 = vld [vmem:[%s1 + $0x2c] sm:$0xf]
  %v170 = vld [vmem:[%s2 + $0x2] sm:$0x1]
  %v171 = vpack.c.bf16 %v165, %v164
  %v172 = vlaneseq
  %v173 = vshrl.u32 %v172, 7
  %v174 = vsub.s32 0, %v173
  %v175 = vrot.slane %v170, %v174
  %v180 = vunpack.c.l.b16 %v166
  %v181 = vunpack.c.l.b16 %v167
  %v182 = vunpack.c.l.b16 %v168
  %v183 = vunpack.c.l.b16 %v169
  %v184 = vpack.c.b16 %v181, %v180
  %v185 = vpack.c.b16 %v183, %v182
  %v189 = vsel %vm43, %v171, 0
  %191 = vmatprep.subr.bf16.mxu0 0
  %192 = vmatpush1.bf16.msra.mxu0 0
  %193 = vmatprep.subr.bf16.mxu0 0
  %194 = vmatpush1.bf16.msra.mxu0 0
  %195 = vmatprep.subr.bf16.mxu0 0
  %196 = vmatpush1.bf16.msra.mxu0 0
  %197 = vmatprep.subr.bf16.mxu0 0
  %198 = vmatpush1.bf16.msra.mxu0 0
  %199 = vmatprep.subr.bf16.mxu0 0
  %200 = vmatpush1.bf16.msra.mxu0 0
  %201 = vmatprep.subr.bf16.mxu0 0
  %202 = vmatpush1.bf16.msra.mxu0 0
  %203 = vmatprep.subr.bf16.mxu0 0
  %204 = vmatpush1.bf16.msra.mxu0 %v185
  %205 = vmatprep.subr.bf16.mxu0 0
  %206 = vmatpush1.bf16.msra.mxu0 %v184
  %207 = vmatprep.subr.bf16.mxu0 0
  %208 = vmatpush2.bf16.msra.mxu0 0
  %209 = vmatprep.subr.bf16.mxu0 0
  %210 = vmatpush2.bf16.msra.mxu0 0
  %211 = vmatprep.subr.bf16.mxu0 0
  %212 = vmatpush2.bf16.msra.mxu0 0
  %213 = vmatprep.subr.bf16.mxu0 0
  %214 = vmatpush2.bf16.msra.mxu0 0
  %215 = vmatprep.subr.bf16.mxu0 0
  %216 = vmatpush2.bf16.msra.mxu0 0
  %217 = vmatprep.subr.bf16.mxu0 0
  %218 = vmatpush2.bf16.msra.mxu0 0
  %219 = vmatprep.subr.bf16.mxu0 0
  %220 = vmatpush2.bf16.msra.mxu0 0
  %221 = vmatprep.subr.bf16.mxu0 0
  %222 = vmatpush2.bf16.msra.mxu0 0
  %223 = vmatprep.mubr.bf16.mxu0 0
  %224 = vmatmul.mubr.bf16.gmra.mxu0 %v189
  %v225 = vpop.f32.mrf.mxu0
  %v226 = vadd.f32 %v175, %v225
  %v227 = vpop.f32.mrf.mxu0
  %v228 = vpop.f32.mrf.mxu0
  %v229 = vadd.f32 %v175, %v228
  %v230 = vpop.f32.mrf.mxu0
  %231 = vdwg.mxu0
  %vm232 = vcmp.ge.f32.partialorder %v226, 0.0
  %vm233 = vcmp.ge.f32.partialorder %v229, 0.0
  %v234 = vmul.f32 %v226, 0.01
  %v235 = vmul.f32 %v229, 0.01
  %v236 = vsel %vm232, %v226, %v234
  %v237 = vsel %vm233, %v229, %v235
  %v238 = vld [vmem:[%s1 + $0x30] sm:$0xf]
  %v239 = vld [vmem:[%s1 + $0x34] sm:$0xf]
  %v240 = vld [vmem:[%s1 + $0x38] sm:$0xf]
  %v241 = vld [vmem:[%s1 + $0x3c] sm:$0xf]
  %v242 = vld [vmem:[%s2 + $0x3] sm:$0x1]
  %v243 = vpack.c.bf16 %v237, %v236
  %v244 = vlaneseq
  %v245 = vshrl.u32 %v244, 7
  %v246 = vsub.s32 0, %v245
  %v247 = vrot.slane %v242, %v246
  %v252 = vunpack.c.l.b16 %v238
  %v253 = vunpack.c.l.b16 %v239
  %v254 = vunpack.c.l.b16 %v240
  %v255 = vunpack.c.l.b16 %v241
  %v256 = vpack.c.b16 %v253, %v252
  %v257 = vpack.c.b16 %v255, %v254
  %v261 = vsel %vm43, %v243, 0
  %263 = vmatprep.subr.bf16.mxu0 0
  %264 = vmatpush1.bf16.msra.mxu0 0
  %265 = vmatprep.subr.bf16.mxu0 0
  %266 = vmatpush1.bf16.msra.mxu0 0
  %267 = vmatprep.subr.bf16.mxu0 0
  %268 = vmatpush1.bf16.msra.mxu0 0
  %269 = vmatprep.subr.bf16.mxu0 0
  %270 = vmatpush1.bf16.msra.mxu0 0
  %271 = vmatprep.subr.bf16.mxu0 0
  %272 = vmatpush1.bf16.msra.mxu0 0
  %273 = vmatprep.subr.bf16.mxu0 0
  %274 = vmatpush1.bf16.msra.mxu0 0
  %275 = vmatprep.subr.bf16.mxu0 0
  %276 = vmatpush1.bf16.msra.mxu0 %v257
  %277 = vmatprep.subr.bf16.mxu0 0
  %278 = vmatpush1.bf16.msra.mxu0 %v256
  %279 = vmatprep.subr.bf16.mxu0 0
  %280 = vmatpush2.bf16.msra.mxu0 0
  %281 = vmatprep.subr.bf16.mxu0 0
  %282 = vmatpush2.bf16.msra.mxu0 0
  %283 = vmatprep.subr.bf16.mxu0 0
  %284 = vmatpush2.bf16.msra.mxu0 0
  %285 = vmatprep.subr.bf16.mxu0 0
  %286 = vmatpush2.bf16.msra.mxu0 0
  %287 = vmatprep.subr.bf16.mxu0 0
  %288 = vmatpush2.bf16.msra.mxu0 0
  %289 = vmatprep.subr.bf16.mxu0 0
  %290 = vmatpush2.bf16.msra.mxu0 0
  %291 = vmatprep.subr.bf16.mxu0 0
  %292 = vmatpush2.bf16.msra.mxu0 0
  %293 = vmatprep.subr.bf16.mxu0 0
  %294 = vmatpush2.bf16.msra.mxu0 0
  %295 = vmatprep.mubr.bf16.mxu0 0
  %296 = vmatmul.mubr.bf16.gmra.mxu0 %v261
  %v297 = vpop.f32.mrf.mxu0
  %v298 = vadd.f32 %v247, %v297
  %v299 = vpop.f32.mrf.mxu0
  %v300 = vpop.f32.mrf.mxu0
  %v301 = vadd.f32 %v247, %v300
  %v302 = vpop.f32.mrf.mxu0
  %303 = vdwg.mxu0
  %v304 = vld [vmem:[%s1 + $0x40] sm:$0xf]
  %v305 = vld [vmem:[%s1 + $0x44] sm:$0xf]
  %v306 = vld [vmem:[%s2 + $0x4] sm:$0x1]
  %v307 = vpack.c.bf16 %v301, %v298
  %v308 = vlaneseq
  %v309 = vshrl.u32 %v308, 7
  %v310 = vsub.s32 0, %v309
  %v311 = vrot.slane %v306, %v310
  %v314 = vunpack.c.l.b16 %v304
  %v315 = vunpack.c.l.b16 %v305
  %v316 = vpack.c.b16 %v315, %v314
  %vm318 = vcmask 130048
  %v320 = vsel %vm318, %v307, 0
  %322 = vmatprep.subr.bf16.mxu0 0
  %323 = vmatpush1.bf16.msra.mxu0 0
  %324 = vmatprep.subr.bf16.mxu0 0
  %325 = vmatpush1.bf16.msra.mxu0 0
  %326 = vmatprep.subr.bf16.mxu0 0
  %327 = vmatpush1.bf16.msra.mxu0 0
  %328 = vmatprep.subr.bf16.mxu0 0
  %329 = vmatpush1.bf16.msra.mxu0 0
  %330 = vmatprep.subr.bf16.mxu0 0
  %331 = vmatpush1.bf16.msra.mxu0 0
  %332 = vmatprep.subr.bf16.mxu0 0
  %333 = vmatpush1.bf16.msra.mxu0 0
  %334 = vmatprep.subr.bf16.mxu0 0
  %335 = vmatpush1.bf16.msra.mxu0 0
  %336 = vmatprep.subr.bf16.mxu0 0
  %337 = vmatpush1.bf16.msra.mxu0 %v316
  %338 = vmatprep.subr.bf16.mxu0 0
  %339 = vmatpush2.bf16.msra.mxu0 0
  %340 = vmatprep.subr.bf16.mxu0 0
  %341 = vmatpush2.bf16.msra.mxu0 0
  %342 = vmatprep.subr.bf16.mxu0 0
  %343 = vmatpush2.bf16.msra.mxu0 0
  %344 = vmatprep.subr.bf16.mxu0 0
  %345 = vmatpush2.bf16.msra.mxu0 0
  %346 = vmatprep.subr.bf16.mxu0 0
  %347 = vmatpush2.bf16.msra.mxu0 0
  %348 = vmatprep.subr.bf16.mxu0 0
  %349 = vmatpush2.bf16.msra.mxu0 0
  %350 = vmatprep.subr.bf16.mxu0 0
  %351 = vmatpush2.bf16.msra.mxu0 0
  %352 = vmatprep.subr.bf16.mxu0 0
  %353 = vmatpush2.bf16.msra.mxu0 0
  %354 = vmatprep.mubr.bf16.mxu0 0
  %355 = vmatmul.mubr.bf16.gmra.mxu0 %v320
  %v356 = vpop.f32.mrf.mxu0
  %v357 = vadd.f32 %v311, %v356
  %v358 = vpop.f32.mrf.mxu0
  %v359 = vpop.f32.mrf.mxu0
  %v360 = vadd.f32 %v311, %v359
  %v361 = vpop.f32.mrf.mxu0
  %362 = vdwg.mxu0
  %vm363 = vcmp.ge.f32.partialorder %v357, 0.0
  %vm364 = vcmp.ge.f32.partialorder %v360, 0.0
  %v365 = vmul.f32 %v357, 0.01
  %v366 = vmul.f32 %v360, 0.01
  %v367 = vsel %vm363, %v357, %v365
  %v368 = vsel %vm364, %v360, %v366
  %v369 = vld [vmem:[%s1 + $0x48] sm:$0xf]
  %v370 = vld [vmem:[%s1 + $0x4c] sm:$0xf]
  %v371 = vld [vmem:[%s1 + $0x50] sm:$0xf]
  %v372 = vld [vmem:[%s1 + $0x54] sm:$0xf]
  %v373 = vld [vmem:[%s1 + $0x58] sm:$0xf]
  %v374 = vld [vmem:[%s1 + $0x5c] sm:$0xf]
  %v375 = vld [vmem:[%s1 + $0x60] sm:$0xf]
  %v376 = vld [vmem:[%s1 + $0x64] sm:$0xf]
  %v377 = vld [vmem:[%s2 + $0x5] sm:$0x1]
  %v378 = vpack.c.bf16 %v368, %v367
  %v379 = vlaneseq
  %v380 = vshrl.u32 %v379, 7
  %v381 = vsub.s32 0, %v380
  %v382 = vrot.slane %v377, %v381
  %v391 = vunpack.c.l.b16 %v369
  %v392 = vunpack.c.l.b16 %v370
  %v393 = vunpack.c.l.b16 %v371
  %v394 = vunpack.c.l.b16 %v372
  %v395 = vunpack.c.l.b16 %v373
  %v396 = vunpack.c.l.b16 %v374
  %v397 = vunpack.c.l.b16 %v375
  %v398 = vunpack.c.l.b16 %v376
  %v399 = vpack.c.b16 %v392, %v391
  %v400 = vpack.c.b16 %v394, %v393
  %v401 = vpack.c.b16 %v396, %v395
  %v402 = vpack.c.b16 %v398, %v397
  %vm407 = vcmask 523264
  %v409 = vsel %vm407, %v378, 0
  %411 = vmatprep.subr.bf16.mxu0 0
  %412 = vmatpush1.bf16.msra.mxu0 0
  %413 = vmatprep.subr.bf16.mxu0 0
  %414 = vmatpush1.bf16.msra.mxu0 0
  %415 = vmatprep.subr.bf16.mxu0 0
  %416 = vmatpush1.bf16.msra.mxu0 0
  %417 = vmatprep.subr.bf16.mxu0 0
  %418 = vmatpush1.bf16.msra.mxu0 0
  %419 = vmatprep.subr.bf16.mxu0 0
  %420 = vmatpush1.bf16.msra.mxu0 %v402
  %421 = vmatprep.subr.bf16.mxu0 0
  %422 = vmatpush1.bf16.msra.mxu0 %v401
  %423 = vmatprep.subr.bf16.mxu0 0
  %424 = vmatpush1.bf16.msra.mxu0 %v400
  %425 = vmatprep.subr.bf16.mxu0 0
  %426 = vmatpush1.bf16.msra.mxu0 %v399
  %427 = vmatprep.subr.bf16.mxu0 0
  %428 = vmatpush2.bf16.msra.mxu0 0
  %429 = vmatprep.subr.bf16.mxu0 0
  %430 = vmatpush2.bf16.msra.mxu0 0
  %431 = vmatprep.subr.bf16.mxu0 0
  %432 = vmatpush2.bf16.msra.mxu0 0
  %433 = vmatprep.subr.bf16.mxu0 0
  %434 = vmatpush2.bf16.msra.mxu0 0
  %435 = vmatprep.subr.bf16.mxu0 0
  %436 = vmatpush2.bf16.msra.mxu0 0
  %437 = vmatprep.subr.bf16.mxu0 0
  %438 = vmatpush2.bf16.msra.mxu0 0
  %439 = vmatprep.subr.bf16.mxu0 0
  %440 = vmatpush2.bf16.msra.mxu0 0
  %441 = vmatprep.subr.bf16.mxu0 0
  %442 = vmatpush2.bf16.msra.mxu0 0
  %443 = vmatprep.mubr.bf16.mxu0 0
  %444 = vmatmul.mubr.bf16.gmra.mxu0 %v409
  %v445 = vpop.f32.mrf.mxu0
  %v446 = vadd.f32 %v382, %v445
  %v447 = vpop.f32.mrf.mxu0
  %v448 = vpop.f32.mrf.mxu0
  %v449 = vadd.f32 %v382, %v448
  %v450 = vpop.f32.mrf.mxu0
  %451 = vdwg.mxu0
  %vm452 = vcmp.ge.f32.partialorder %v446, 0.0
  %vm453 = vcmp.ge.f32.partialorder %v449, 0.0
  %v454 = vmul.f32 %v446, 0.01
  %v455 = vmul.f32 %v449, 0.01
  %v456 = vsel %vm452, %v446, %v454
  %v457 = vsel %vm453, %v449, %v455
  %v458 = vld [vmem:[%s1 + $0x68] sm:$0xf]
  %v459 = vld [vmem:[%s1 + $0x6c] sm:$0xf]
  %v460 = vld [vmem:[%s1 + $0x70] sm:$0xf]
  %v461 = vld [vmem:[%s1 + $0x74] sm:$0xf]
  %v462 = vld [vmem:[%s1 + $0x78] sm:$0xf]
  %v463 = vld [vmem:[%s1 + $0x7c] sm:$0xf]
  %v464 = vld [vmem:[%s1 + $0x80] sm:$0xf]
  %v465 = vld [vmem:[%s1 + $0x84] sm:$0xf]
  %v466 = vld [vmem:[%s2 + $0x6] sm:$0x1]
  %v467 = vpack.c.bf16 %v457, %v456
  %v468 = vlaneseq
  %v469 = vshrl.u32 %v468, 7
  %v470 = vsub.s32 0, %v469
  %v471 = vrot.slane %v466, %v470
  %v480 = vunpack.c.l.b16 %v458
  %v481 = vunpack.c.l.b16 %v459
  %v482 = vunpack.c.l.b16 %v460
  %v483 = vunpack.c.l.b16 %v461
  %v484 = vunpack.c.l.b16 %v462
  %v485 = vunpack.c.l.b16 %v463
  %v486 = vunpack.c.l.b16 %v464
  %v487 = vunpack.c.l.b16 %v465
  %v488 = vpack.c.b16 %v481, %v480
  %v489 = vpack.c.b16 %v483, %v482
  %v490 = vpack.c.b16 %v485, %v484
  %v491 = vpack.c.b16 %v487, %v486
  %v497 = vsel %vm407, %v467, 0
  %499 = vmatprep.subr.bf16.mxu0 0
  %500 = vmatpush1.bf16.msra.mxu0 0
  %501 = vmatprep.subr.bf16.mxu0 0
  %502 = vmatpush1.bf16.msra.mxu0 0
  %503 = vmatprep.subr.bf16.mxu0 0
  %504 = vmatpush1.bf16.msra.mxu0 0
  %505 = vmatprep.subr.bf16.mxu0 0
  %506 = vmatpush1.bf16.msra.mxu0 0
  %507 = vmatprep.subr.bf16.mxu0 0
  %508 = vmatpush1.bf16.msra.mxu0 %v491
  %509 = vmatprep.subr.bf16.mxu0 0
  %510 = vmatpush1.bf16.msra.mxu0 %v490
  %511 = vmatprep.subr.bf16.mxu0 0
  %512 = vmatpush1.bf16.msra.mxu0 %v489
  %513 = vmatprep.subr.bf16.mxu0 0
  %514 = vmatpush1.bf16.msra.mxu0 %v488
  %515 = vmatprep.subr.bf16.mxu0 0
  %516 = vmatpush2.bf16.msra.mxu0 0
  %517 = vmatprep.subr.bf16.mxu0 0
  %518 = vmatpush2.bf16.msra.mxu0 0
  %519 = vmatprep.subr.bf16.mxu0 0
  %520 = vmatpush2.bf16.msra.mxu0 0
  %521 = vmatprep.subr.bf16.mxu0 0
  %522 = vmatpush2.bf16.msra.mxu0 0
  %523 = vmatprep.subr.bf16.mxu0 0
  %524 = vmatpush2.bf16.msra.mxu0 0
  %525 = vmatprep.subr.bf16.mxu0 0
  %526 = vmatpush2.bf16.msra.mxu0 0
  %527 = vmatprep.subr.bf16.mxu0 0
  %528 = vmatpush2.bf16.msra.mxu0 0
  %529 = vmatprep.subr.bf16.mxu0 0
  %530 = vmatpush2.bf16.msra.mxu0 0
  %531 = vmatprep.mubr.bf16.mxu0 0
  %532 = vmatmul.mubr.bf16.gmra.mxu0 %v497
  %v533 = vpop.f32.mrf.mxu0
  %v534 = vadd.f32 %v471, %v533
  %v535 = vpop.f32.mrf.mxu0
  %v536 = vpop.f32.mrf.mxu0
  %v537 = vadd.f32 %v471, %v536
  %v538 = vpop.f32.mrf.mxu0
  %539 = vdwg.mxu0
  %vm540 = vcmp.ge.f32.partialorder %v534, 0.0
  %vm541 = vcmp.ge.f32.partialorder %v537, 0.0
  %v542 = vmul.f32 %v534, 0.01
  %v543 = vmul.f32 %v537, 0.01
  %v544 = vsel %vm540, %v534, %v542
  %v545 = vsel %vm541, %v537, %v543
  %v546 = vld [vmem:[%s1 + $0x88] sm:$0xf]
  %v547 = vld [vmem:[%s1 + $0x8c] sm:$0xf]
  %v548 = vld [vmem:[%s1 + $0x90] sm:$0xf]
  %v549 = vld [vmem:[%s1 + $0x94] sm:$0xf]
  %v550 = vld [vmem:[%s1 + $0x98] sm:$0xf]
  %v551 = vld [vmem:[%s1 + $0x9c] sm:$0xf]
  %v552 = vld [vmem:[%s1 + $0xa0] sm:$0xf]
  %v553 = vld [vmem:[%s1 + $0xa4] sm:$0xf]
  %v554 = vld [vmem:[%s2 + $0x7] sm:$0x1]
  %v555 = vpack.c.bf16 %v545, %v544
  %v556 = vlaneseq
  %v557 = vshrl.u32 %v556, 7
  %v558 = vsub.s32 0, %v557
  %v559 = vrot.slane %v554, %v558
  %v568 = vunpack.c.l.b16 %v546
  %v569 = vunpack.c.l.b16 %v547
  %v570 = vunpack.c.l.b16 %v548
  %v571 = vunpack.c.l.b16 %v549
  %v572 = vunpack.c.l.b16 %v550
  %v573 = vunpack.c.l.b16 %v551
  %v574 = vunpack.c.l.b16 %v552
  %v575 = vunpack.c.l.b16 %v553
  %v576 = vpack.c.b16 %v569, %v568
  %v577 = vpack.c.b16 %v571, %v570
  %v578 = vpack.c.b16 %v573, %v572
  %v579 = vpack.c.b16 %v575, %v574
  %v585 = vsel %vm407, %v555, 0
  %587 = vmatprep.subr.bf16.mxu0 0
  %588 = vmatpush1.bf16.msra.mxu0 0
  %589 = vmatprep.subr.bf16.mxu0 0
  %590 = vmatpush1.bf16.msra.mxu0 0
  %591 = vmatprep.subr.bf16.mxu0 0
  %592 = vmatpush1.bf16.msra.mxu0 0
  %593 = vmatprep.subr.bf16.mxu0 0
  %594 = vmatpush1.bf16.msra.mxu0 0
  %595 = vmatprep.subr.bf16.mxu0 0
  %596 = vmatpush1.bf16.msra.mxu0 %v579
  %597 = vmatprep.subr.bf16.mxu0 0
  %598 = vmatpush1.bf16.msra.mxu0 %v578
  %599 = vmatprep.subr.bf16.mxu0 0
  %600 = vmatpush1.bf16.msra.mxu0 %v577
  %601 = vmatprep.subr.bf16.mxu0 0
  %602 = vmatpush1.bf16.msra.mxu0 %v576
  %603 = vmatprep.subr.bf16.mxu0 0
  %604 = vmatpush2.bf16.msra.mxu0 0
  %605 = vmatprep.subr.bf16.mxu0 0
  %606 = vmatpush2.bf16.msra.mxu0 0
  %607 = vmatprep.subr.bf16.mxu0 0
  %608 = vmatpush2.bf16.msra.mxu0 0
  %609 = vmatprep.subr.bf16.mxu0 0
  %610 = vmatpush2.bf16.msra.mxu0 0
  %611 = vmatprep.subr.bf16.mxu0 0
  %612 = vmatpush2.bf16.msra.mxu0 0
  %613 = vmatprep.subr.bf16.mxu0 0
  %614 = vmatpush2.bf16.msra.mxu0 0
  %615 = vmatprep.subr.bf16.mxu0 0
  %616 = vmatpush2.bf16.msra.mxu0 0
  %617 = vmatprep.subr.bf16.mxu0 0
  %618 = vmatpush2.bf16.msra.mxu0 0
  %619 = vmatprep.mubr.bf16.mxu0 0
  %620 = vmatmul.mubr.bf16.gmra.mxu0 %v585
  %v621 = vpop.f32.mrf.mxu0
  %v622 = vadd.f32 %v559, %v621
  %v623 = vpop.f32.mrf.mxu0
  %v624 = vpop.f32.mrf.mxu0
  %v625 = vadd.f32 %v559, %v624
  %v626 = vpop.f32.mrf.mxu0
  %627 = vdwg.mxu0
  %628 = vst [vmem:[%s3] sm:$0xff] %v622
  %629 = vst [vmem:[%s3 + $0x8] sm:$0xff] %v625
  // Predicated region
  $region14: #{_forward_impl.1} parent=0 // pred_check
    _
  $region15: #{_forward_impl.1} parent=0 // pred_check_branch
    %631 = sbr.rel (0) target = $region17
  $region16: #{_forward_impl.1} parent=0 // pred_region
    _
  $region17: #{_forward_impl.1} parent=0 // pred_fallthru
    _
  // Predicated region
  $region18: #{_forward_impl.1} parent=0 // pred_check
    _
  $region19: #{_forward_impl.1} parent=0 // pred_check_branch
    %633 = sbr.rel (0) target = $region21
  $region20: #{_forward_impl.1} parent=0 // pred_region
    _
  $region21: #{_forward_impl.1} parent=0 // pred_fallthru
    _

</llo_original>
